<compile_context>
chip_gen: v5e
topology: v5e:2x2
jax: 0.10.0
libtpu: 0.0.40
codegen_flags: <defaults>
</compile_context>

<pallas_src>
import functools
import math

import jax
import jax.numpy as jnp
from jax.experimental import pallas as pl
from jax.experimental.pallas import tpu as pltpu


def _round_up(n, m):
    return ((n + m - 1) // m) * m


def _gelu(x, approximate):
    if approximate:
        # tanh-based gelu -> EUP slot (off the VALU critical path). Opt-in only:
        # deviates slightly from torch's default exact gelu.
        c = math.sqrt(2.0 / math.pi)
        return 0.5 * x * (1.0 + jnp.tanh(c * (x + 0.044715 * (x * x * x))))
    # erf-based gelu: matches torch.nn.functional.gelu (module default).
    return 0.5 * x * (1.0 + jax.lax.erf(x * (1.0 / math.sqrt(2.0))))


# ---------------------------------------------------------------------------
# Kernel bodies
# ---------------------------------------------------------------------------

def _ffn_resident_kernel(x_ref, w1_ref, b1_ref, w2_ref, b2_ref, o_ref, *,
                         approximate_gelu, compute_dtype):
    # Weights have constant block indices -> fetched into VMEM once, reused by
    # every row tile. x_ref/o_ref: (tm, D); w1: (D, H); w2: (H, D).
    x = x_ref[...]
    w1 = w1_ref[...]
    w2 = w2_ref[...]
    if compute_dtype is not None:
        x, w1, w2 = (a.astype(compute_dtype) for a in (x, w1, w2))
    h = jnp.dot(x, w1, preferred_element_type=jnp.float32)
    h = h + b1_ref[...].astype(jnp.float32)
    h = _gelu(h, approximate_gelu)
    h = h.astype(w2.dtype)
    y = jnp.dot(h, w2, preferred_element_type=jnp.float32)
    # TODO(synk): dropout is identity in eval mode; training-mode dropout with a
    # PRNG mask is not implemented here.
    o_ref[...] = (y + b2_ref[...].astype(jnp.float32)).astype(o_ref.dtype)


def _ffn_stream_kernel(x_ref, w1_ref, b1_ref, w2_ref, b2_ref, o_ref, acc_ref, *,
                       approximate_gelu, compute_dtype):
    # Hidden dim H is the (innermost, "arbitrary") reduction grid axis; weight
    # chunks stream from HBM. acc_ref: (tm, D) f32 accumulator.
    kh = pl.program_id(1)

    @pl.when(kh == 0)
    def _():
        acc_ref[...] = jnp.zeros_like(acc_ref)

    x = x_ref[...]
    w1 = w1_ref[...]
    w2 = w2_ref[...]
    if compute_dtype is not None:
        x, w1, w2 = (a.astype(compute_dtype) for a in (x, w1, w2))
    h = jnp.dot(x, w1, preferred_element_type=jnp.float32)
    h = h + b1_ref[...].astype(jnp.float32)
    h = _gelu(h, approximate_gelu)          # elementwise -> exact per H chunk
    h = h.astype(w2.dtype)
    acc_ref[...] += jnp.dot(h, w2, preferred_element_type=jnp.float32)

    @pl.when(kh == pl.num_programs(1) - 1)
    def _():
        o_ref[...] = (acc_ref[...]
                      + b2_ref[...].astype(jnp.float32)).astype(o_ref.dtype)


# ---------------------------------------------------------------------------
# Wrapper
# ---------------------------------------------------------------------------

def _vmem_budget_bytes():
    phys = 64 << 20  # conservative default = v7x per-TensorCore VMEM
    try:
        info = pltpu.get_tpu_info()
        phys = int(getattr(info, "vmem_capacity_bytes", phys))
    except Exception:
        pass
    # ~20% headroom for compiler scratch, semaphores and implicit temporaries:
    # ~51 MiB on v7x (64 MiB phys), ~102 MiB on v5e/v6e (128 MiB phys).
    return max(16 << 20, int(phys * 0.8))


def ffn_forward(x, w1, b1, w2, b2, *, row_tile=None, hidden_tile=None,
                weights_resident=None, approximate_gelu=False,
                use_bf16_compute=False):
    """x: (B, S, D); w1: (D, H); b1: (H,); w2: (H, D); b2: (D,)."""
    B, S, D = x.shape
    Din, H = w1.shape
    assert Din == D and w2.shape == (H, D)
    assert b1.shape == (H,) and b2.shape == (D,)

    M = B * S
    x2 = x.reshape(M, D)
    b1_2d = b1.reshape(1, H)
    b2_2d = b2.reshape(1, D)

    x_item = jnp.dtype(x.dtype).itemsize
    w_item = jnp.dtype(w1.dtype).itemsize
    b_item = jnp.dtype(b1.dtype).itemsize
    out_item = x_item

    compute_dtype = None
    if use_bf16_compute and jnp.dtype(x.dtype) == jnp.dtype(jnp.float32):
        compute_dtype = jnp.bfloat16  # opt-in: f32-accumulated bf16 MXU operands
    c_item = (jnp.dtype(compute_dtype).itemsize
              if compute_dtype is not None else w_item)

    # Row (token) tile: rounded to the dtype's sublane packing.
    pack = 8 * max(1, 4 // x_item)           # 8 (f32), 16 (bf16), 32 (int8/fp8)
    auto_rows = row_tile is None
    if auto_rows:
        row_tile = 1024 if x_item <= 2 else 512
    tm = min(_round_up(row_tile, pack), _round_up(M, pack))

    # Ensure at least 2 row tiles when possible (v7x shards the "parallel" row
    # axis across its two TensorCores).
    if auto_rows and pl.cdiv(M, tm) == 1 and M > pack:
        tm_half = max(pack, _round_up(pl.cdiv(M, 2), pack))
        if pl.cdiv(M, tm_half) >= 2:
            tm = tm_half

    budget = _vmem_budget_bytes()
    slack = 2 << 20

    def resident_bytes(tm_):
        w_vmem = 2 * ((D * H + H * D) * w_item + 8 * (H + D) * b_item)
        io = 2 * tm_ * D * x_item + 2 * tm_ * D * out_item
        tmp = tm_ * H * 4 + tm_ * H * c_item + tm_ * D * 4
        return w_vmem + io + tmp + slack

    def stream_bytes(tm_, th_):
        blocks = 2 * (tm_ * D * x_item + D * th_ * w_item + 8 * th_ * b_item
                      + th_ * D * w_item + 8 * D * b_item + tm_ * D * out_item)
        tmp = tm_ * th_ * 4 + tm_ * th_ * c_item
        return blocks + tmp + tm_ * D * 4 + slack

    if weights_resident is None:
        resident = (hidden_tile is None) and (resident_bytes(tm) <= budget)
    else:
        resident = bool(weights_resident)

    if resident:
        # Shrink row tile if a forced-resident config would not fit the budget.
        while resident_bytes(tm) > budget and tm > pack:
            new_tm = max(pack, _round_up(tm // 2, pack))
            if new_tm == tm:
                break
            tm = new_tm
        th = H
    else:
        if hidden_tile is not None:
            th = hidden_tile
        elif H <= 512:
            th = H
        else:
            th = H
            # 256-aligned chunks first (v6e/v7x MXUs are 256 wide); 384/128 kept
            # as fallbacks (fine on v5e's 128-wide MXU).
            for cand in (512, 256, 384, 128):
                if H % cand == 0:
                    th = cand
                    break
        assert H % th == 0, "hidden_tile must divide the hidden dim"
        assert th == H or th % 128 == 0, "hidden tile must be a multiple of 128"
        if auto_rows:
            while stream_bytes(tm, th) > budget and tm > max(pack, 256):
                new_tm = max(pack, _round_up(tm // 2, pack))
                if new_tm == tm:
                    break
                tm = new_tm
        if hidden_tile is None:
            for cand in (256, 128):
                if stream_bytes(tm, th) <= budget:
                    break
                if H % cand == 0 and cand < th:
                    th = cand

    n_rows = pl.cdiv(M, tm)  # partial last block is masked by Pallas (no pad)

    kernel_kwargs = dict(approximate_gelu=approximate_gelu,
                         compute_dtype=compute_dtype)

    if resident:
        kernel = functools.partial(_ffn_resident_kernel, **kernel_kwargs)
        grid = (n_rows,)
        in_specs = [
            pl.BlockSpec((tm, D), lambda i: (i, 0)),   # x row tile
            pl.BlockSpec((D, H), lambda i: (0, 0)),    # w1 (resident)
            pl.BlockSpec((1, H), lambda i: (0, 0)),    # b1 (resident)
            pl.BlockSpec((H, D), lambda i: (0, 0)),    # w2 (resident)
            pl.BlockSpec((1, D), lambda i: (0, 0)),    # b2 (resident)
        ]
        out_specs = pl.BlockSpec((tm, D), lambda i: (i, 0))
        scratch_shapes = ()
        dim_sem = ("parallel",)
        w_reads = 1
    else:
        kernel = functools.partial(_ffn_stream_kernel, **kernel_kwargs)
        grid = (n_rows, H // th)
        in_specs = [
            pl.BlockSpec((tm, D), lambda i, k: (i, 0)),   # x row tile
            pl.BlockSpec((D, th), lambda i, k: (0, k)),   # w1 hidden chunk
            pl.BlockSpec((1, th), lambda i, k: (0, k)),   # b1 hidden chunk
            pl.BlockSpec((th, D), lambda i, k: (k, 0)),   # w2 hidden chunk
            pl.BlockSpec((1, D), lambda i, k: (0, 0)),    # b2 (constant)
        ]
        out_specs = pl.BlockSpec((tm, D), lambda i, k: (i, 0))
        scratch_shapes = (pltpu.VMEM((tm, D), jnp.float32),)
        dim_sem = ("parallel", "arbitrary")
        w_reads = n_rows

    cost = pl.CostEstimate(
        flops=4 * M * D * H,                      # two matmuls, 2*M*D*H each
        transcendentals=M * H,                    # erf/tanh inside gelu
        bytes_accessed=(M * D * x_item + M * D * out_item
                        + w_reads * (D * H + H * D) * w_item
                        + (H + D) * b_item),
    )

    out2 = pl.pallas_call(
        kernel,
        out_shape=jax.ShapeDtypeStruct((M, D), x.dtype),
        grid_spec=pltpu.PrefetchScalarGridSpec(
            num_scalar_prefetch=0,
            grid=grid,
            in_specs=in_specs,
            out_specs=out_specs,
            scratch_shapes=scratch_shapes,
        ),
        compiler_params=pltpu.CompilerParams(
            dimension_semantics=dim_sem,
            vmem_limit_bytes=int(budget),
        ),
        cost_estimate=cost,
    )(x2, w1, b1_2d, w2, b2_2d)

    return out2.reshape(B, S, D)


def _reference_ffn(x, w1, b1, w2, b2):
    h = x.astype(jnp.float32) @ w1.astype(jnp.float32) + b1.astype(jnp.float32)
    h = 0.5 * h * (1.0 + jax.lax.erf(h / jnp.sqrt(2.0).astype(jnp.float32)))
    y = h @ w2.astype(jnp.float32) + b2.astype(jnp.float32)
    return y.astype(x.dtype)


if __name__ == "__main__":
    # Small config consistent with the module: dim=128, hidden_dim=256,
    # batch=2, seq=16, activation="gelu", dropout in eval mode (identity).
    B, S, D, HID = 2, 16, 128, 256

    key = jax.random.PRNGKey(0)
    k_x, k_w1, k_b1, k_w2, k_b2 = jax.random.split(key, 5)

    x = jax.random.normal(k_x, (B, S, D), dtype=jnp.float32)
    w1 = jax.random.uniform(k_w1, (D, HID), jnp.float32,
                            -1.0 / math.sqrt(D), 1.0 / math.sqrt(D))
    b1 = jax.random.uniform(k_b1, (HID,), jnp.float32,
                            -1.0 / math.sqrt(D), 1.0 / math.sqrt(D))
    w2 = jax.random.uniform(k_w2, (HID, D), jnp.float32,
                            -1.0 / math.sqrt(HID), 1.0 / math.sqrt(HID))
    b2 = jax.random.uniform(k_b2, (D,), jnp.float32,
                            -1.0 / math.sqrt(HID), 1.0 / math.sqrt(HID))

    ref = _reference_ffn(x.reshape(-1, D), w1, b1, w2, b2).reshape(B, S, D)

    # 1) Auto config: VMEM-resident weights, row axis split so >=2 parallel tiles.
    out = jax.block_until_ready(ffn_forward(x, w1, b1, w2, b2))
    assert out.shape == (B, S, D)
    assert jnp.allclose(out, ref, atol=1e-4, rtol=1e-4), "mismatch (auto/resident)"

    # 2) Forced weight-streaming path: multi-step hidden reduction + accumulator.
    out_s = jax.block_until_ready(
        ffn_forward(x, w1, b1, w2, b2, row_tile=16, hidden_tile=128,
                    weights_resident=False))
    assert jnp.allclose(out_s, ref, atol=1e-4, rtol=1e-4), "mismatch (streaming)"

    # 3) Non-divisible row tiling: partial last row block is masked by Pallas
    #    (no host-side pad/slice copies).
    out_p = jax.block_until_ready(
        ffn_forward(x, w1, b1, w2, b2, row_tile=24, weights_resident=True))
    assert jnp.allclose(out_p, ref, atol=1e-4, rtol=1e-4), "mismatch (partial tile)"

    print("KERNEL_OK")
</pallas_src>

<mosaic_0001>
module attributes {stable_mosaic.version = 11 : i64} {
  func.func @_ffn_resident_kernel(%arg0: i32, %arg1: memref<16x128xf32, #tpu.memory_space<vmem>>, %arg2: memref<128x256xf32, #tpu.memory_space<vmem>>, %arg3: memref<1x256xf32, #tpu.memory_space<vmem>>, %arg4: memref<256x128xf32, #tpu.memory_space<vmem>>, %arg5: memref<1x128xf32, #tpu.memory_space<vmem>>, %arg6: memref<16x128xf32, #tpu.memory_space<vmem>>) attributes {dimension_semantics = [#tpu.dimension_semantics<parallel>], iteration_bounds = array<i64: 2>, scalar_prefetch = 0 : i64, scratch_operands = 0 : i64, tpu.core_type = #tpu.core_type<tc>, window_params = [{transform_indices = @transform_0, window_bounds = array<i64: 16, 128>}, {pipeline_mode = #tpu.pipeline_mode<synchronous>, transform_indices = @transform_1, window_bounds = array<i64: 128, 256>}, {pipeline_mode = #tpu.pipeline_mode<synchronous>, transform_indices = @transform_2, window_bounds = array<i64: 1, 256>}, {pipeline_mode = #tpu.pipeline_mode<synchronous>, transform_indices = @transform_3, window_bounds = array<i64: 256, 128>}, {pipeline_mode = #tpu.pipeline_mode<synchronous>, transform_indices = @transform_4, window_bounds = array<i64: 1, 128>}, {transform_indices = @transform_5, window_bounds = array<i64: 16, 128>}]} {
    %c0 = arith.constant 0 : index
    %c0_0 = arith.constant 0 : index
    %0 = vector.load %arg1[%c0, %c0_0] : memref<16x128xf32, #tpu.memory_space<vmem>>, vector<16x128xf32>
    %c0_1 = arith.constant 0 : index
    %c0_2 = arith.constant 0 : index
    %1 = vector.load %arg2[%c0_1, %c0_2] : memref<128x256xf32, #tpu.memory_space<vmem>>, vector<128x256xf32>
    %c0_3 = arith.constant 0 : index
    %c0_4 = arith.constant 0 : index
    %2 = vector.load %arg4[%c0_3, %c0_4] : memref<256x128xf32, #tpu.memory_space<vmem>>, vector<256x128xf32>
    %cst = arith.constant dense<0.000000e+00> : vector<16x256xf32>
    %3 = tpu.matmul %0, %1, %cst {dimension_numbers = #tpu.dot_dimension_numbers<[1], [0], [0], [1], [0, 0, 1, 1], [], []>} : vector<16x128xf32>, vector<128x256xf32>, vector<16x256xf32> -> vector<16x256xf32>
    %c0_5 = arith.constant 0 : index
    %c0_6 = arith.constant 0 : index
    %4 = vector.load %arg3[%c0_5, %c0_6] : memref<1x256xf32, #tpu.memory_space<vmem>>, vector<1x256xf32>
    %5 = vector.broadcast %4 : vector<1x256xf32> to vector<16x256xf32>
    %6 = arith.addf %3, %5 : vector<16x256xf32>
    %cst_7 = arith.constant 5.000000e-01 : f32
    %7 = vector.broadcast %cst_7 : f32 to vector<16x256xf32>
    %8 = arith.mulf %7, %6 : vector<16x256xf32>
    %cst_8 = arith.constant 0.707106769 : f32
    %9 = vector.broadcast %cst_8 : f32 to vector<16x256xf32>
    %10 = arith.mulf %6, %9 : vector<16x256xf32>
    %11 = math.erf %10 : vector<16x256xf32>
    %cst_9 = arith.constant 1.000000e+00 : f32
    %12 = vector.broadcast %cst_9 : f32 to vector<16x256xf32>
    %13 = arith.addf %12, %11 : vector<16x256xf32>
    %14 = arith.mulf %8, %13 : vector<16x256xf32>
    %cst_10 = arith.constant dense<0.000000e+00> : vector<16x128xf32>
    %15 = tpu.matmul %14, %2, %cst_10 {dimension_numbers = #tpu.dot_dimension_numbers<[1], [0], [0], [1], [0, 0, 1, 1], [], []>} : vector<16x256xf32>, vector<256x128xf32>, vector<16x128xf32> -> vector<16x128xf32>
    %c0_11 = arith.constant 0 : index
    %c0_12 = arith.constant 0 : index
    %16 = vector.load %arg5[%c0_11, %c0_12] : memref<1x128xf32, #tpu.memory_space<vmem>>, vector<1x128xf32>
    %17 = vector.broadcast %16 : vector<1x128xf32> to vector<16x128xf32>
    %18 = arith.addf %15, %17 : vector<16x128xf32>
    %c0_13 = arith.constant 0 : index
    %c0_14 = arith.constant 0 : index
    %19 = vector.load %arg6[%c0_13, %c0_14] : memref<16x128xf32, #tpu.memory_space<vmem>>, vector<16x128xf32>
    tpu.vector_store %arg6[%c0_13, %c0_14], %18 {strides = array<i32>} : memref<16x128xf32, #tpu.memory_space<vmem>>, vector<16x128xf32>,
    return
  }
  func.func @transform_0(%arg0: i32) -> (i32, i32) {
    %c0_i32 = arith.constant 0 : i32
    %c0_i32_0 = arith.constant 0 : i32
    return %arg0, %c0_i32 : i32, i32
  }
  func.func @transform_1(%arg0: i32) -> (i32, i32) {
    %c0_i32 = arith.constant 0 : i32
    %c0_i32_0 = arith.constant 0 : i32
    %c0_i32_1 = arith.constant 0 : i32
    return %c0_i32, %c0_i32_0 : i32, i32
  }
  func.func @transform_2(%arg0: i32) -> (i32, i32) {
    %c0_i32 = arith.constant 0 : i32
    %c0_i32_0 = arith.constant 0 : i32
    %c0_i32_1 = arith.constant 0 : i32
    return %c0_i32, %c0_i32_0 : i32, i32
  }
  func.func @transform_3(%arg0: i32) -> (i32, i32) {
    %c0_i32 = arith.constant 0 : i32
    %c0_i32_0 = arith.constant 0 : i32
    %c0_i32_1 = arith.constant 0 : i32
    return %c0_i32, %c0_i32_0 : i32, i32
  }
  func.func @transform_4(%arg0: i32) -> (i32, i32) {
    %c0_i32 = arith.constant 0 : i32
    %c0_i32_0 = arith.constant 0 : i32
    %c0_i32_1 = arith.constant 0 : i32
    return %c0_i32, %c0_i32_0 : i32, i32
  }
  func.func @transform_5(%arg0: i32) -> (i32, i32) {
    %c0_i32 = arith.constant 0 : i32
    %c0_i32_0 = arith.constant 0 : i32
    return %arg0, %c0_i32 : i32, i32
  }
}

</mosaic_0001>

<llo_original>
// kernel: tpu_custom_call.1
$region0: #{tpu_custom_call.1}
  #allocation0 [shape = 'u32[]', space=smem, size = 0x4, offset = 0x4, fixed_abs, tag = 'smem constant byte address 0x4 - core index']
  #allocation1 [shape = 'u32[72,128]{1,0:T(1,128)}', space=vmem, size = 0x9000, scoped, tag = 'internal scratch']
  %s0 = inlined_call_operand.hbm [shape: f32[32,128], index: 0, kind: input, shape index: {}]
  %s1 = inlined_call_operand.hbm [shape: f32[128,256], index: 1, kind: input, shape index: {}]
  %s2 = inlined_call_operand.hbm [shape: f32[1,256], index: 2, kind: input, shape index: {}]
  %s3 = inlined_call_operand.hbm [shape: f32[256,128], index: 3, kind: input, shape index: {}]
  %s4 = inlined_call_operand.vmem [shape: f32[1,128], index: 4, kind: input, shape index: {}]
  %s5 = inlined_call_operand.hbm [shape: f32[32,128], index: 5, kind: output, shape index: {}]
  %s6 = sld [smem:[#allocation0]]
  $region69: #{tpu_custom_call.1} parent=0
    _
  %s8 = ssub.s32 1, %s6
  %s9 = scalar_select 0, %s8, %s6
  $region1: #{tpu_custom_call.1} parent=0
    #allocation2 [shape = 'u8[16384]{0}', space=vmem, size = 0x4000, scoped, tag = 'input window, operand 0']
    #allocation3 [shape = 's32[2]{0}', space=sflag, size = 0x8, scoped, tag = 'scoped memory for tpu_custom_call.1']
    #allocation4 [shape = 's32[2]{0}', space=sflag, size = 0x8, scoped, tag = 'scoped memory for tpu_custom_call.1']
    #allocation5 [shape = 'u8[131072]{0}', space=vmem, size = 0x20000, scoped, tag = 'input window, operand 1, single buffered']
    #allocation6 [shape = 's32[1]{0}', space=sflag, size = 0x4, scoped, tag = 'scoped memory for tpu_custom_call.1']
    #allocation7 [shape = 'u8[1024]{0}', space=vmem, size = 0x400, scoped, tag = 'input window, operand 2, single buffered']
    #allocation8 [shape = 'u8[131072]{0}', space=vmem, size = 0x20000, scoped, tag = 'input window, operand 3, single buffered']
    #allocation9 [shape = 's32[1]{0}', space=sflag, size = 0x4, scoped, tag = 'scoped memory for tpu_custom_call.1']
    #allocation10 [shape = 'u8[16384]{0}', space=vmem, size = 0x4000, scoped, tag = 'output window, operand 0']
    %10 = vsyncpa [#allocation3], 0
    %s11 = scalar_lea.sflag [#allocation3], 1
    %12 = vsyncpa %s11, 0
    %13 = vsyncpa [#allocation6], 0
    %14 = vsyncpa [#allocation9], 0
    %15 = vsyncpa [#allocation4], 0
    %s16 = scalar_lea.sflag [#allocation4], 1
    %17 = vsyncpa %s16, 0
    loop: start=0, step=1, limit=4
    $region2: #{tpu_custom_call.1} parent=1 // loop_pre_header
      _
    $region3: #{tpu_custom_call.1} parent=1 // loop_header
      %s19 = sphi 0, %s23
      %p20 = scmp.ge.s32.totalorder %s19, 4
      %s29 = sphi 0, %s31
      %s32 = sphi 0, %s29
      %s33 = sphi 0, %s32
      %s49 = sphi 0, %s33
      %s53 = sphi 0, %s53
      %s55 = sphi 0, %s53
      %s56 = sphi 0, %s55
      %s70 = sphi 0, %s56
      %s74 = sphi 0, %s74
      %s76 = sphi 0, %s74
      %s77 = sphi 0, %s76
      %s91 = sphi 0, %s77
      %s95 = sphi 0, %s95
      %s97 = sphi 0, %s95
      %s98 = sphi 0, %s97
      %s112 = sphi 0, %s98
      %s116 = sphi 0, %s116
      %s118 = sphi 0, %s116
      %s119 = sphi 0, %s118
      %s133 = sphi 0, %s119
      %s139 = sphi 0, %s141
      %s142 = sphi 0, %s139
      %s143 = sphi 0, %s142
      %s159 = sphi 0, %s143
    $region4: #{tpu_custom_call.1} parent=1 // loop_header_branch
      %22 = sbr.rel (%p20) target = $region8
    $region5: #{tpu_custom_call.1} parent=1 // loop_body
      %s24 = ssub.s32 %s19, 1
      %s25 = ssub.s32 %s19, 2
      %s26 = sadd.s32 %s19, 1
      %s27 = ssub.s32 %s19, %s26
      %p28 = scmp.eq.s32.totalorder %s27, 0
      %s30 = sadd.s32 %s29, 1
      %s31 = scalar_select %p28, %s29, %s30
      %p34 = pneg %p28
      %p35 = scmp.eq.s32.totalorder %s19, 1
      %p36 = por %p34, %p35
      %p37 = scmp.ne.s32.totalorder %s29, %s32
      %p38 = scmp.eq.s32.totalorder %s19, 0
      %p39 = por %p37, %p38
      %p40 = scmp.ne.s32.totalorder %s29, %s32
      %p41 = scmp.eq.s32.totalorder %s24, 1
      %p42 = por %p40, %p41
      %p43 = scmp.ne.s32.totalorder %s32, %s33
      %p44 = scmp.eq.s32.totalorder %s24, 0
      %p45 = por %p43, %p44
      %p46 = scmp.ne.s32.totalorder %s32, %s33
      %p47 = scmp.eq.s32.totalorder %s25, 1
      %p48 = por %p46, %p47
      %p50 = scmp.ne.s32.totalorder %s33, %s49
      %p51 = scmp.eq.s32.totalorder %s25, 0
      %p52 = por %p50, %p51
      %s54 = sadd.s32 %s53, 1
      %p57 = scmp.eq.s32.totalorder %s19, 1
      %p58 = scmp.ne.s32.totalorder %s53, %s55
      %p59 = scmp.eq.s32.totalorder %s19, 0
      %p60 = por %p58, %p59
      %p61 = scmp.ne.s32.totalorder %s53, %s55
      %p62 = scmp.eq.s32.totalorder %s24, 1
      %p63 = por %p61, %p62
      %p64 = scmp.ne.s32.totalorder %s55, %s56
      %p65 = scmp.eq.s32.totalorder %s24, 0
      %p66 = por %p64, %p65
      %p67 = scmp.ne.s32.totalorder %s55, %s56
      %p68 = scmp.eq.s32.totalorder %s25, 1
      %p69 = por %p67, %p68
      %p71 = scmp.ne.s32.totalorder %s56, %s70
      %p72 = scmp.eq.s32.totalorder %s25, 0
      %p73 = por %p71, %p72
      %s75 = sadd.s32 %s74, 1
      %p78 = scmp.eq.s32.totalorder %s19, 1
      %p79 = scmp.ne.s32.totalorder %s74, %s76
      %p80 = scmp.eq.s32.totalorder %s19, 0
      %p81 = por %p79, %p80
      %p82 = scmp.ne.s32.totalorder %s74, %s76
      %p83 = scmp.eq.s32.totalorder %s24, 1
      %p84 = por %p82, %p83
      %p85 = scmp.ne.s32.totalorder %s76, %s77
      %p86 = scmp.eq.s32.totalorder %s24, 0
      %p87 = por %p85, %p86
      %p88 = scmp.ne.s32.totalorder %s76, %s77
      %p89 = scmp.eq.s32.totalorder %s25, 1
      %p90 = por %p88, %p89
      %p92 = scmp.ne.s32.totalorder %s77, %s91
      %p93 = scmp.eq.s32.totalorder %s25, 0
      %p94 = por %p92, %p93
      %s96 = sadd.s32 %s95, 1
      %p99 = scmp.eq.s32.totalorder %s19, 1
      %p100 = scmp.ne.s32.totalorder %s95, %s97
      %p101 = scmp.eq.s32.totalorder %s19, 0
      %p102 = por %p100, %p101
      %p103 = scmp.ne.s32.totalorder %s95, %s97
      %p104 = scmp.eq.s32.totalorder %s24, 1
      %p105 = por %p103, %p104
      %p106 = scmp.ne.s32.totalorder %s97, %s98
      %p107 = scmp.eq.s32.totalorder %s24, 0
      %p108 = por %p106, %p107
      %p109 = scmp.ne.s32.totalorder %s97, %s98
      %p110 = scmp.eq.s32.totalorder %s25, 1
      %p111 = por %p109, %p110
      %p113 = scmp.ne.s32.totalorder %s98, %s112
      %p114 = scmp.eq.s32.totalorder %s25, 0
      %p115 = por %p113, %p114
      %s117 = sadd.s32 %s116, 1
      %p120 = scmp.eq.s32.totalorder %s19, 1
      %p121 = scmp.ne.s32.totalorder %s116, %s118
      %p122 = scmp.eq.s32.totalorder %s19, 0
      %p123 = por %p121, %p122
      %p124 = scmp.ne.s32.totalorder %s116, %s118
      %p125 = scmp.eq.s32.totalorder %s24, 1
      %p126 = por %p124, %p125
      %p127 = scmp.ne.s32.totalorder %s118, %s119
      %p128 = scmp.eq.s32.totalorder %s24, 0
      %p129 = por %p127, %p128
      %p130 = scmp.ne.s32.totalorder %s118, %s119
      %p131 = scmp.eq.s32.totalorder %s25, 1
      %p132 = por %p130, %p131
      %p134 = scmp.ne.s32.totalorder %s119, %s133
      %p135 = scmp.eq.s32.totalorder %s25, 0
      %p136 = por %p134, %p135
      %s137 = ssub.s32 %s19, %s26
      %p138 = scmp.eq.s32.totalorder %s137, 0
      %s140 = sadd.s32 %s139, 1
      %s141 = scalar_select %p138, %s139, %s140
      %p144 = pneg %p138
      %p145 = scmp.eq.s32.totalorder %s19, 1
      %p146 = por %p144, %p145
      %p147 = scmp.ne.s32.totalorder %s139, %s142
      %p148 = scmp.eq.s32.totalorder %s19, 0
      %p149 = por %p147, %p148
      %p150 = scmp.ne.s32.totalorder %s139, %s142
      %p151 = scmp.eq.s32.totalorder %s24, 1
      %p152 = por %p150, %p151
      %p153 = scmp.ne.s32.totalorder %s142, %s143
      %p154 = scmp.eq.s32.totalorder %s24, 0
      %p155 = por %p153, %p154
      %p156 = scmp.ne.s32.totalorder %s142, %s143
      %p157 = scmp.eq.s32.totalorder %s25, 1
      %p158 = por %p156, %p157
      %p160 = scmp.ne.s32.totalorder %s143, %s159
      %p161 = scmp.eq.s32.totalorder %s25, 0
      %p162 = por %p160, %p161
      %p163 = scmp.le.s32.totalorder 1, %s19
      %p164 = scmp.lt.s32.totalorder %s19, 3
      %p165 = pnand %p163, %p164
      %p166 = pneg %p165
      // Predicated region
      $region9: #{tpu_custom_call.1} parent=5 // pred_check
        _
      $region10: #{tpu_custom_call.1} parent=5 // pred_check_branch
        %168 = sbr.rel (%p165) target = $region12
      $region11: #{tpu_custom_call.1} parent=5 // pred_region
        %s169 = ssub.s32 %s19, 1
        // Predicated region
        $region13: #{tpu_custom_call.1} parent=11 // pred_check
          %p170 = pneg %p66
        $region14: #{tpu_custom_call.1} parent=11 // pred_check_branch
          %172 = sbr.rel (%p170) target = $region16
        $region15: #{tpu_custom_call.1} parent=11 // pred_region
          %174 = vsyncadd [#allocation6], 0
          %s175 = sshll.u32 %s1, 4
          %s176 = int_to_ptr.hbm [resolvable:$true] %s175
          %s177 = sshll.u32 [#allocation5], 4
          %s178 = int_to_ptr.vmem [resolvable:$true] %s177
          %183 = dma.hbm_to_vmem [thread:$0]  %s176, 4096, %s178, [#allocation6], 256, 256, 16
        $region16: #{tpu_custom_call.1} parent=11 // pred_fallthru
          _
        // Predicated region
        $region17: #{tpu_custom_call.1} parent=11 // pred_check
          %p184 = pneg %p87
        $region18: #{tpu_custom_call.1} parent=11 // pred_check_branch
          %186 = sbr.rel (%p184) target = $region20
        $region19: #{tpu_custom_call.1} parent=11 // pred_region
          %188 = vsyncadd [#allocation6], 0
          %s190 = sshll.u32 %s2, 4
          %s191 = int_to_ptr.hbm [resolvable:$true] %s190
          %s192 = sshll.u32 [#allocation7], 4
          %s193 = int_to_ptr.vmem [resolvable:$true] %s192
          %195 = dma.hbm_to_vmem [thread:$0]  %s191, 32, %s193, [#allocation6]
        $region20: #{tpu_custom_call.1} parent=11 // pred_fallthru
          _
        // Predicated region
        $region21: #{tpu_custom_call.1} parent=11 // pred_check
          %p196 = pneg %p108
        $region22: #{tpu_custom_call.1} parent=11 // pred_check_branch
          %198 = sbr.rel (%p196) target = $region24
        $region23: #{tpu_custom_call.1} parent=11 // pred_region
          %200 = vsyncadd [#allocation9], 0
          %s201 = sshll.u32 %s3, 4
          %s202 = int_to_ptr.hbm [resolvable:$true] %s201
          %s203 = sshll.u32 [#allocation8], 4
          %s204 = int_to_ptr.vmem [resolvable:$true] %s203
          %209 = dma.hbm_to_vmem [thread:$0]  %s202, 4096, %s204, [#allocation9], 128, 128, 8
        $region24: #{tpu_custom_call.1} parent=11 // pred_fallthru
          _
        // Predicated region
        $region25: #{tpu_custom_call.1} parent=11 // pred_check
          %p210 = pneg %p129
        $region26: #{tpu_custom_call.1} parent=11 // pred_check_branch
          %212 = sbr.rel (%p210) target = $region28
        $region27: #{tpu_custom_call.1} parent=11 // pred_region
          _
        $region28: #{tpu_custom_call.1} parent=11 // pred_fallthru
          _
      $region12: #{tpu_custom_call.1} parent=5 // pred_fallthru
        _
      %p213 = scmp.lt.s32.totalorder %s19, 2
      // Predicated region
      $region29: #{tpu_custom_call.1} parent=5 // pred_check
        %p214 = pneg %p213
      $region30: #{tpu_custom_call.1} parent=5 // pred_check_branch
        %216 = sbr.rel (%p214) target = $region32
      $region31: #{tpu_custom_call.1} parent=5 // pred_region
        // Predicated region
        $region33: #{tpu_custom_call.1} parent=31 // pred_check
          %p217 = pneg %p39
        $region34: #{tpu_custom_call.1} parent=31 // pred_check_branch
          %219 = sbr.rel (%p217) target = $region36
        $region35: #{tpu_custom_call.1} parent=31 // pred_region
          %s220 = sand.u32 %s29, 1
          %s221 = scalar_lea.sflag [#allocation3], %s220
          %s222 = sand.u32 %s29, 1
          %s223 = smul.addr %s222, 16
          %s224 = scalar_lea.vmem [#allocation2], %s223
          %s225 = smul.u32 2, %s19
          %227 = vsyncadd %s221, 0
          %s228 = smul.addr %s225, 8
          %s229 = scalar_lea.hbm %s0, %s228
          %s230 = sshll.u32 %s229, 4
          %s231 = int_to_ptr.hbm [resolvable:$true] %s230
          %s232 = sshll.u32 %s224, 4
          %s233 = int_to_ptr.vmem [resolvable:$true] %s232
          %238 = dma.hbm_to_vmem [thread:$0]  %s231, 256, %s233, %s221, 128, 128, 8
        $region36: #{tpu_custom_call.1} parent=31 // pred_fallthru
          _
      $region32: #{tpu_custom_call.1} parent=5 // pred_fallthru
        _
      %p239 = scmp.le.s32.totalorder 1, %s19
      %p240 = scmp.lt.s32.totalorder %s19, 3
      %p241 = pnand %p239, %p240
      %p242 = pneg %p241
      // Predicated region
      $region37: #{tpu_custom_call.1} parent=5 // pred_check
        _
      $region38: #{tpu_custom_call.1} parent=5 // pred_check_branch
        %244 = sbr.rel (%p241) target = $region40
      $region39: #{tpu_custom_call.1} parent=5 // pred_region
        %s245 = ssub.s32 %s19, 1
        %s246 = sand.u32 %s32, 1
        %s247 = scalar_lea.sflag [#allocation3], %s246
        %s248 = sand.u32 %s32, 1
        %s249 = smul.addr %s248, 16
        %s250 = scalar_lea.vmem [#allocation2], %s249
        // Predicated region
        $region41: #{tpu_custom_call.1} parent=39 // pred_check
          %p251 = pneg %p45
        $region42: #{tpu_custom_call.1} parent=39 // pred_check_branch
          %253 = sbr.rel (%p251) target = $region44
        $region43: #{tpu_custom_call.1} parent=39 // pred_region
          %255 = dma.done %s247, 256
        $region44: #{tpu_custom_call.1} parent=39 // pred_fallthru
          _
        // Predicated region
        $region45: #{tpu_custom_call.1} parent=39 // pred_check
          %p256 = pneg %p66
        $region46: #{tpu_custom_call.1} parent=39 // pred_check_branch
          %258 = sbr.rel (%p256) target = $region48
        $region47: #{tpu_custom_call.1} parent=39 // pred_region
          %260 = dma.done [#allocation6], 4096
        $region48: #{tpu_custom_call.1} parent=39 // pred_fallthru
          _
        // Predicated region
        $region49: #{tpu_custom_call.1} parent=39 // pred_check
          %p261 = pneg %p87
        $region50: #{tpu_custom_call.1} parent=39 // pred_check_branch
          %263 = sbr.rel (%p261) target = $region52
        $region51: #{tpu_custom_call.1} parent=39 // pred_region
          %265 = dma.done [#allocation6], 32
        $region52: #{tpu_custom_call.1} parent=39 // pred_fallthru
          _
        // Predicated region
        $region53: #{tpu_custom_call.1} parent=39 // pred_check
          %p266 = pneg %p108
        $region54: #{tpu_custom_call.1} parent=39 // pred_check_branch
          %268 = sbr.rel (%p266) target = $region56
        $region55: #{tpu_custom_call.1} parent=39 // pred_region
          %270 = dma.done [#allocation9], 4096
        $region56: #{tpu_custom_call.1} parent=39 // pred_fallthru
          _
        %s271 = sand.u32 %s32, 1
        %s272 = scalar_lea.sflag [#allocation3], %s271
        %s273 = sand.u32 %s32, 1
        %s274 = smul.addr %s273, 16
        %s275 = scalar_lea.vmem [#allocation2], %s274
        %p276 = pneg %p45
        %p277 = pneg %p42
        %p278 = pneg %p66
        %p279 = pneg %p63
        %p280 = pneg %p87
        %p281 = pneg %p84
        %p282 = pneg %p108
        %p283 = pneg %p105
        %p284 = pneg %p129
        %p285 = pneg %p126
        %p286 = pneg %p155
        %p287 = pneg %p152
        %s288 = sand.u32 %s142, 1
        %s289 = scalar_lea.sflag [#allocation4], %s288
        %s290 = sand.u32 %s142, 1
        %s291 = smul.addr %s290, 16
        %s292 = scalar_lea.vmem [#allocation10], %s291
        %s293 = smul.u32 2, %s24
        %s294 = smul.u32 2, %s24
        %v295 = vld [vmem:[%s250] sm:$0xff]
        %v296 = vld [vmem:[%s250 + $0x8] sm:$0xff]
        %v297 = vld [vmem:[#allocation5] sm:$0xff]
        %v298 = vld [vmem:[#allocation5 + $0x8] sm:$0xff]
        %v299 = vld [vmem:[#allocation5 + $0x10] sm:$0xff]
        %v300 = vld [vmem:[#allocation5 + $0x18] sm:$0xff]
        %v301 = vld [vmem:[#allocation5 + $0x20] sm:$0xff]
        %v302 = vld [vmem:[#allocation5 + $0x28] sm:$0xff]
        %v303 = vld [vmem:[#allocation5 + $0x30] sm:$0xff]
        %v304 = vld [vmem:[#allocation5 + $0x38] sm:$0xff]
        %v305 = vld [vmem:[#allocation5 + $0x40] sm:$0xff]
        %v306 = vld [vmem:[#allocation5 + $0x48] sm:$0xff]
        %v307 = vld [vmem:[#allocation5 + $0x50] sm:$0xff]
        %v308 = vld [vmem:[#allocation5 + $0x58] sm:$0xff]
        %v309 = vld [vmem:[#allocation5 + $0x60] sm:$0xff]
        %v310 = vld [vmem:[#allocation5 + $0x68] sm:$0xff]
        %v311 = vld [vmem:[#allocation5 + $0x70] sm:$0xff]
        %v312 = vld [vmem:[#allocation5 + $0x78] sm:$0xff]
        %v313 = vld [vmem:[#allocation5 + $0x80] sm:$0xff]
        %v314 = vld [vmem:[#allocation5 + $0x88] sm:$0xff]
        %v315 = vld [vmem:[#allocation5 + $0x90] sm:$0xff]
        %v316 = vld [vmem:[#allocation5 + $0x98] sm:$0xff]
        %v317 = vld [vmem:[#allocation5 + $0xa0] sm:$0xff]
        %v318 = vld [vmem:[#allocation5 + $0xa8] sm:$0xff]
        %v319 = vld [vmem:[#allocation5 + $0xb0] sm:$0xff]
        %v320 = vld [vmem:[#allocation5 + $0xb8] sm:$0xff]
        %v321 = vld [vmem:[#allocation5 + $0xc0] sm:$0xff]
        %v322 = vld [vmem:[#allocation5 + $0xc8] sm:$0xff]
        %v323 = vld [vmem:[#allocation5 + $0xd0] sm:$0xff]
        %v324 = vld [vmem:[#allocation5 + $0xd8] sm:$0xff]
        %v325 = vld [vmem:[#allocation5 + $0xe0] sm:$0xff]
        %v326 = vld [vmem:[#allocation5 + $0xe8] sm:$0xff]
        %v327 = vld [vmem:[#allocation5 + $0xf0] sm:$0xff]
        %v328 = vld [vmem:[#allocation5 + $0xf8] sm:$0xff]
        %v329 = vld [vmem:[#allocation8] sm:$0xff]
        %v330 = vld [vmem:[#allocation8 + $0x8] sm:$0xff]
        %v331 = vld [vmem:[#allocation8 + $0x10] sm:$0xff]
        %v332 = vld [vmem:[#allocation8 + $0x18] sm:$0xff]
        %v333 = vld [vmem:[#allocation8 + $0x20] sm:$0xff]
        %v334 = vld [vmem:[#allocation8 + $0x28] sm:$0xff]
        %v335 = vld [vmem:[#allocation8 + $0x30] sm:$0xff]
        %v336 = vld [vmem:[#allocation8 + $0x38] sm:$0xff]
        %v337 = vld [vmem:[#allocation8 + $0x40] sm:$0xff]
        %v338 = vld [vmem:[#allocation8 + $0x48] sm:$0xff]
        %v339 = vld [vmem:[#allocation8 + $0x50] sm:$0xff]
        %v340 = vld [vmem:[#allocation8 + $0x58] sm:$0xff]
        %v341 = vld [vmem:[#allocation8 + $0x60] sm:$0xff]
        %v342 = vld [vmem:[#allocation8 + $0x68] sm:$0xff]
        %v343 = vld [vmem:[#allocation8 + $0x70] sm:$0xff]
        %v344 = vld [vmem:[#allocation8 + $0x78] sm:$0xff]
        %v345 = vld [vmem:[#allocation8 + $0x80] sm:$0xff]
        %v346 = vld [vmem:[#allocation8 + $0x88] sm:$0xff]
        %v347 = vld [vmem:[#allocation8 + $0x90] sm:$0xff]
        %v348 = vld [vmem:[#allocation8 + $0x98] sm:$0xff]
        %v349 = vld [vmem:[#allocation8 + $0xa0] sm:$0xff]
        %v350 = vld [vmem:[#allocation8 + $0xa8] sm:$0xff]
        %v351 = vld [vmem:[#allocation8 + $0xb0] sm:$0xff]
        %v352 = vld [vmem:[#allocation8 + $0xb8] sm:$0xff]
        %v353 = vld [vmem:[#allocation8 + $0xc0] sm:$0xff]
        %v354 = vld [vmem:[#allocation8 + $0xc8] sm:$0xff]
        %v355 = vld [vmem:[#allocation8 + $0xd0] sm:$0xff]
        %v356 = vld [vmem:[#allocation8 + $0xd8] sm:$0xff]
        %v357 = vld [vmem:[#allocation8 + $0xe0] sm:$0xff]
        %v358 = vld [vmem:[#allocation8 + $0xe8] sm:$0xff]
        %v359 = vld [vmem:[#allocation8 + $0xf0] sm:$0xff]
        %v360 = vld [vmem:[#allocation8 + $0xf8] sm:$0xff]
        %v361 = vld [vmem:[#allocation7] sm:$0x3]
        %v363 = vperm.slane %v361, 0
        %v364 = vperm.slane %v361, 1
        %367 = vmatpush.msra.mxu0 %v327
        %368 = vmatpush.msra.mxu0 %v325
        %369 = vmatpush.msra.mxu0 %v323
        %370 = vmatpush.msra.mxu0 %v321
        %371 = vmatpush.msra.mxu0 %v319
        %372 = vmatpush.msra.mxu0 %v317
        %373 = vmatpush.msra.mxu0 %v315
        %374 = vmatpush.msra.mxu0 %v313
        %375 = vmatpush.msra.mxu0 %v311
        %376 = vmatpush.msra.mxu0 %v309
        %377 = vmatpush.msra.mxu0 %v307
        %378 = vmatpush.msra.mxu0 %v305
        %379 = vmatpush.msra.mxu0 %v303
        %380 = vmatpush.msra.mxu0 %v301
        %381 = vmatpush.msra.mxu0 %v299
        %382 = vmatpush.msra.mxu0 %v297
        %383 = vmatmul.f32.gmra.mxu0 %v295
        %v384 = vpop.f32.mrf.mxu0
        %v385 = vadd.f32 %v363, %v384
        %386 = vmatmul.f32.gmra.mxu0 %v296
        %v387 = vpop.f32.mrf.mxu0
        %v388 = vadd.f32 %v363, %v387
        %389 = vdwg.mxu0
        %390 = vmatpush.msra.mxu0 %v328
        %391 = vmatpush.msra.mxu0 %v326
        %392 = vmatpush.msra.mxu0 %v324
        %393 = vmatpush.msra.mxu0 %v322
        %394 = vmatpush.msra.mxu0 %v320
        %395 = vmatpush.msra.mxu0 %v318
        %396 = vmatpush.msra.mxu0 %v316
        %397 = vmatpush.msra.mxu0 %v314
        %398 = vmatpush.msra.mxu0 %v312
        %399 = vmatpush.msra.mxu0 %v310
        %400 = vmatpush.msra.mxu0 %v308
        %401 = vmatpush.msra.mxu0 %v306
        %402 = vmatpush.msra.mxu0 %v304
        %403 = vmatpush.msra.mxu0 %v302
        %404 = vmatpush.msra.mxu0 %v300
        %405 = vmatpush.msra.mxu0 %v298
        %406 = vmatmul.f32.gmra.mxu0 %v295
        %v407 = vpop.f32.mrf.mxu0
        %v408 = vadd.f32 %v364, %v407
        %409 = vmatmul.f32.gmra.mxu0 %v296
        %v410 = vpop.f32.mrf.mxu0
        %v411 = vadd.f32 %v364, %v410
        %412 = vdwg.mxu0
        %v413 = vmul.f32 %v385, 0.5
        %v414 = vmul.f32 %v408, 0.5
        %v415 = vmul.f32 %v388, 0.5
        %v416 = vmul.f32 %v411, 0.5
        %v417 = vmul.f32 %v385, 0.70710677
        %v418 = vmul.f32 %v408, 0.70710677
        %v419 = vmul.f32 %v388, 0.70710677
        %v420 = vmul.f32 %v411, 0.70710677
        %v421 = vmul.f32 %v417, %v417
        %v422 = vmin.f32 16.0, %v421
        %v423 = vmul.f32 %v422, 2.1237322e-06
        %v424 = vadd.f32 %v423, 0.00028619796
        %v425 = vmul.f32 %v422, %v424
        %v426 = vadd.f32 %v425, 0.0036580483
        %v427 = vmul.f32 %v422, %v426
        %v428 = vadd.f32 %v427, 0.05243302
        %v429 = vmul.f32 %v422, %v428
        %v430 = vadd.f32 %v429, 0.18741608
        %v431 = vmul.f32 %v422, %v430
        %v432 = vadd.f32 %v431, 1.1283791
        %v433 = vmul.f32 %v417, %v432
        %v434 = vmul.f32 %v422, 3.8918573e-05
        %v435 = vadd.f32 %v434, 0.001143296
        %v436 = vmul.f32 %v422, %v435
        %v437 = vadd.f32 %v436, 0.014752088
        %v438 = vmul.f32 %v422, %v437
        %v439 = vadd.f32 %v438, 0.112945676
        %v440 = vmul.f32 %v422, %v439
        %v441 = vadd.f32 %v440, 0.4994258
        %v442 = vmul.f32 %v422, %v441
        %v443 = vadd.f32 %v442, 1.0
        %v444 = vrcp.pop %v443
        %v445 = vmul.f32 %v443, %v444
        %v446 = vsub.f32 1.0, %v445
        %v447 = vmul.f32 %v444, %v446
        %v448 = vadd.f32 %v444, %v447
        %vm449 = vweird.f32 %v443
        %vm450 = vweird.f32 %v444
        %vm451 = vmor %vm449, %vm450
        %v452 = vsel %vm451, %v444, %v448
        %v453 = vand.u32 2147483647, %v443
        %vm454 = vcmp.eq.f32.partialorder %v453, 8.507059e+37
        %v455 = vand.u32 %v443, 2147483648
        %v456 = vor.u32 1.1754944e-38, %v455
        %v457 = vsel %vm454, %v456, %v452
        %v458 = vmul.f32 %v433, %v457
        %v459 = vmin.f32 %v458, 1.0
        %v460 = vmax.f32 %v459, -1.0
        %v461 = vmul.f32 %v418, %v418
        %v462 = vmin.f32 16.0, %v461
        %v463 = vmul.f32 %v462, 2.1237322e-06
        %v464 = vadd.f32 %v463, 0.00028619796
        %v465 = vmul.f32 %v462, %v464
        %v466 = vadd.f32 %v465, 0.0036580483
        %v467 = vmul.f32 %v462, %v466
        %v468 = vadd.f32 %v467, 0.05243302
        %v469 = vmul.f32 %v462, %v468
        %v470 = vadd.f32 %v469, 0.18741608
        %v471 = vmul.f32 %v462, %v470
        %v472 = vadd.f32 %v471, 1.1283791
        %v473 = vmul.f32 %v418, %v472
        %v474 = vmul.f32 %v462, 3.8918573e-05
        %v475 = vadd.f32 %v474, 0.001143296
        %v476 = vmul.f32 %v462, %v475
        %v477 = vadd.f32 %v476, 0.014752088
        %v478 = vmul.f32 %v462, %v477
        %v479 = vadd.f32 %v478, 0.112945676
        %v480 = vmul.f32 %v462, %v479
        %v481 = vadd.f32 %v480, 0.4994258
        %v482 = vmul.f32 %v462, %v481
        %v483 = vadd.f32 %v482, 1.0
        %v484 = vrcp.pop %v483
        %v485 = vmul.f32 %v483, %v484
        %v486 = vsub.f32 1.0, %v485
        %v487 = vmul.f32 %v484, %v486
        %v488 = vadd.f32 %v484, %v487
        %vm489 = vweird.f32 %v483
        %vm490 = vweird.f32 %v484
        %vm491 = vmor %vm489, %vm490
        %v492 = vsel %vm491, %v484, %v488
        %v493 = vand.u32 2147483647, %v483
        %vm494 = vcmp.eq.f32.partialorder %v493, 8.507059e+37
        %v495 = vand.u32 %v483, 2147483648
        %v496 = vor.u32 1.1754944e-38, %v495
        %v497 = vsel %vm494, %v496, %v492
        %v498 = vmul.f32 %v473, %v497
        %v499 = vmin.f32 %v498, 1.0
        %v500 = vmax.f32 %v499, -1.0
        %v501 = vmul.f32 %v419, %v419
        %v502 = vmin.f32 16.0, %v501
        %v503 = vmul.f32 %v502, 2.1237322e-06
        %v504 = vadd.f32 %v503, 0.00028619796
        %v505 = vmul.f32 %v502, %v504
        %v506 = vadd.f32 %v505, 0.0036580483
        %v507 = vmul.f32 %v502, %v506
        %v508 = vadd.f32 %v507, 0.05243302
        %v509 = vmul.f32 %v502, %v508
        %v510 = vadd.f32 %v509, 0.18741608
        %v511 = vmul.f32 %v502, %v510
        %v512 = vadd.f32 %v511, 1.1283791
        %v513 = vmul.f32 %v419, %v512
        %v514 = vmul.f32 %v502, 3.8918573e-05
        %v515 = vadd.f32 %v514, 0.001143296
        %v516 = vmul.f32 %v502, %v515
        %v517 = vadd.f32 %v516, 0.014752088
        %v518 = vmul.f32 %v502, %v517
        %v519 = vadd.f32 %v518, 0.112945676
        %v520 = vmul.f32 %v502, %v519
        %v521 = vadd.f32 %v520, 0.4994258
        %v522 = vmul.f32 %v502, %v521
        %v523 = vadd.f32 %v522, 1.0
        %v524 = vrcp.pop %v523
        %v525 = vmul.f32 %v523, %v524
        %v526 = vsub.f32 1.0, %v525
        %v527 = vmul.f32 %v524, %v526
        %v528 = vadd.f32 %v524, %v527
        %vm529 = vweird.f32 %v523
        %vm530 = vweird.f32 %v524
        %vm531 = vmor %vm529, %vm530
        %v532 = vsel %vm531, %v524, %v528
        %v533 = vand.u32 2147483647, %v523
        %vm534 = vcmp.eq.f32.partialorder %v533, 8.507059e+37
        %v535 = vand.u32 %v523, 2147483648
        %v536 = vor.u32 1.1754944e-38, %v535
        %v537 = vsel %vm534, %v536, %v532
        %v538 = vmul.f32 %v513, %v537
        %v539 = vmin.f32 %v538, 1.0
        %v540 = vmax.f32 %v539, -1.0
        %v541 = vmul.f32 %v420, %v420
        %v542 = vmin.f32 16.0, %v541
        %v543 = vmul.f32 %v542, 2.1237322e-06
        %v544 = vadd.f32 %v543, 0.00028619796
        %v545 = vmul.f32 %v542, %v544
        %v546 = vadd.f32 %v545, 0.0036580483
        %v547 = vmul.f32 %v542, %v546
        %v548 = vadd.f32 %v547, 0.05243302
        %v549 = vmul.f32 %v542, %v548
        %v550 = vadd.f32 %v549, 0.18741608
        %v551 = vmul.f32 %v542, %v550
        %v552 = vadd.f32 %v551, 1.1283791
        %v553 = vmul.f32 %v420, %v552
        %v554 = vmul.f32 %v542, 3.8918573e-05
        %v555 = vadd.f32 %v554, 0.001143296
        %v556 = vmul.f32 %v542, %v555
        %v557 = vadd.f32 %v556, 0.014752088
        %v558 = vmul.f32 %v542, %v557
        %v559 = vadd.f32 %v558, 0.112945676
        %v560 = vmul.f32 %v542, %v559
        %v561 = vadd.f32 %v560, 0.4994258
        %v562 = vmul.f32 %v542, %v561
        %v563 = vadd.f32 %v562, 1.0
        %v564 = vrcp.pop %v563
        %v565 = vmul.f32 %v563, %v564
        %v566 = vsub.f32 1.0, %v565
        %v567 = vmul.f32 %v564, %v566
        %v568 = vadd.f32 %v564, %v567
        %vm569 = vweird.f32 %v563
        %vm570 = vweird.f32 %v564
        %vm571 = vmor %vm569, %vm570
        %v572 = vsel %vm571, %v564, %v568
        %v573 = vand.u32 2147483647, %v563
        %vm574 = vcmp.eq.f32.partialorder %v573, 8.507059e+37
        %v575 = vand.u32 %v563, 2147483648
        %v576 = vor.u32 1.1754944e-38, %v575
        %v577 = vsel %vm574, %v576, %v572
        %v578 = vmul.f32 %v553, %v577
        %v579 = vmin.f32 %v578, 1.0
        %v580 = vmax.f32 %v579, -1.0
        %v581 = vadd.f32 %v460, 1.0
        %v582 = vadd.f32 %v500, 1.0
        %v583 = vadd.f32 %v540, 1.0
        %v584 = vadd.f32 %v580, 1.0
        %v585 = vmul.f32 %v413, %v581
        %v586 = vmul.f32 %v414, %v582
        %v587 = vmul.f32 %v415, %v583
        %v588 = vmul.f32 %v416, %v584
        %v589 = vld [vmem:[%s4] sm:$0x1]
        %v591 = vperm.slane %v589, 0
        %593 = vmatpush.msra.mxu0 %v344
        %594 = vmatpush.msra.mxu0 %v343
        %595 = vmatpush.msra.mxu0 %v342
        %596 = vmatpush.msra.mxu0 %v341
        %597 = vmatpush.msra.mxu0 %v340
        %598 = vmatpush.msra.mxu0 %v339
        %599 = vmatpush.msra.mxu0 %v338
        %600 = vmatpush.msra.mxu0 %v337
        %601 = vmatpush.msra.mxu0 %v336
        %602 = vmatpush.msra.mxu0 %v335
        %603 = vmatpush.msra.mxu0 %v334
        %604 = vmatpush.msra.mxu0 %v333
        %605 = vmatpush.msra.mxu0 %v332
        %606 = vmatpush.msra.mxu0 %v331
        %607 = vmatpush.msra.mxu0 %v330
        %608 = vmatpush.msra.mxu0 %v329
        %609 = vmatmul.f32.gmra.mxu0 %v585
        %v610 = vpop.f32.mrf.mxu0
        %v611 = vadd.f32 %v591, %v610
        %612 = vmatmul.f32.gmra.mxu0 %v587
        %v613 = vpop.f32.mrf.mxu0
        %v614 = vadd.f32 %v591, %v613
        %615 = vdwg.mxu0
        %616 = vmatpush.msra.mxu0 %v360
        %617 = vmatpush.msra.mxu0 %v359
        %618 = vmatpush.msra.mxu0 %v358
        %619 = vmatpush.msra.mxu0 %v357
        %620 = vmatpush.msra.mxu0 %v356
        %621 = vmatpush.msra.mxu0 %v355
        %622 = vmatpush.msra.mxu0 %v354
        %623 = vmatpush.msra.mxu0 %v353
        %624 = vmatpush.msra.mxu0 %v352
        %625 = vmatpush.msra.mxu0 %v351
        %626 = vmatpush.msra.mxu0 %v350
        %627 = vmatpush.msra.mxu0 %v349
        %628 = vmatpush.msra.mxu0 %v348
        %629 = vmatpush.msra.mxu0 %v347
        %630 = vmatpush.msra.mxu0 %v346
        %631 = vmatpush.msra.mxu0 %v345
        %632 = vmatmul.f32.gmra.mxu0 %v586
        %v633 = vpop.f32.mrf.mxu0
        %v634 = vadd.f32 %v611, %v633
        %635 = vmatmul.f32.gmra.mxu0 %v588
        %v636 = vpop.f32.mrf.mxu0
        %v637 = vadd.f32 %v614, %v636
        %638 = vdwg.mxu0
        %639 = vst [vmem:[%s292] sm:$0xff] %v634
        %640 = vst [vmem:[%s292 + $0x8] sm:$0xff] %v637
        %s641 = sand.u32 %s142, 1
        %s642 = scalar_lea.sflag [#allocation4], %s641
        %s643 = sand.u32 %s142, 1
        %s644 = smul.addr %s643, 16
        %s645 = scalar_lea.vmem [#allocation10], %s644
        // Predicated region
        $region57: #{tpu_custom_call.1} parent=39 // pred_check
          %p646 = pneg %p152
        $region58: #{tpu_custom_call.1} parent=39 // pred_check_branch
          %648 = sbr.rel (%p646) target = $region60
        $region59: #{tpu_custom_call.1} parent=39 // pred_region
          %s649 = smul.u32 2, %s24
          %651 = vsyncadd %s642, 0
          %s652 = smul.addr %s649, 8
          %s653 = scalar_lea.hbm %s5, %s652
          %s654 = sshll.u32 %s645, 4
          %s655 = int_to_ptr.vmem [resolvable:$true] %s654
          %s656 = sshll.u32 %s653, 4
          %s657 = int_to_ptr.hbm [resolvable:$true] %s656
          %662 = dma.vmem_to_hbm [thread:$0]  %s655, 256, %s657, %s642, 128, 128, 8
        $region60: #{tpu_custom_call.1} parent=39 // pred_fallthru
          _
      $region40: #{tpu_custom_call.1} parent=5 // pred_fallthru
        _
      %p663 = scmp.le.s32.totalorder 2, %s19
      // Predicated region
      $region61: #{tpu_custom_call.1} parent=5 // pred_check
        %p664 = pneg %p663
      $region62: #{tpu_custom_call.1} parent=5 // pred_check_branch
        %666 = sbr.rel (%p664) target = $region64
      $region63: #{tpu_custom_call.1} parent=5 // pred_region
        %s667 = ssub.s32 %s19, 2
        // Predicated region
        $region65: #{tpu_custom_call.1} parent=63 // pred_check
          %p668 = pneg %p158
        $region66: #{tpu_custom_call.1} parent=63 // pred_check_branch
          %670 = sbr.rel (%p668) target = $region68
        $region67: #{tpu_custom_call.1} parent=63 // pred_region
          %s671 = sand.u32 %s143, 1
          %s672 = scalar_lea.sflag [#allocation4], %s671
          %s673 = sand.u32 %s143, 1
          %s674 = smul.addr %s673, 16
          %s675 = scalar_lea.vmem [#allocation10], %s674
          %677 = dma.done %s672, 256
        $region68: #{tpu_custom_call.1} parent=63 // pred_fallthru
          _
      $region64: #{tpu_custom_call.1} parent=5 // pred_fallthru
        _
    $region6: #{tpu_custom_call.1} parent=1 // loop_footer
      %s23 = sadd.s32 1, %s19
    $region7: #{tpu_custom_call.1} parent=1 // loop_footer_branch
      %18 = sbr.rel target = $region3
    $region8: #{tpu_custom_call.1} parent=1 // loop_exit
      _
    %678 = vsyncpa [#allocation3], 1
    %s679 = scalar_lea.sflag [#allocation3], 1
    %680 = vsyncpa %s679, 1
    %681 = vsyncpa [#allocation6], 1
    %682 = vsyncpa [#allocation9], 1
    %683 = vsyncpa [#allocation4], 1
    %s684 = scalar_lea.sflag [#allocation4], 1
    %685 = vsyncpa %s684, 1

</llo_original>
